<compile_context>
chip_gen: v5e
topology: v5e:2x2
jax: 0.10.0
libtpu: 0.0.40
codegen_flags: <defaults>
</compile_context>

<pallas_src>
from typing import NamedTuple
import functools

import jax
import jax.numpy as jnp
from jax.experimental import pallas as pl
from jax.experimental.pallas import tpu as pltpu


class AdaLayerNormZeroOutput(NamedTuple):
    hidden_states: jax.Array
    img_gate_msa: jax.Array
    img_shift_mlp: jax.Array
    img_scale_mlp: jax.Array
    img_gate_mlp: jax.Array
    encoder_hidden_states: jax.Array
    cond_gate_msa: jax.Array
    cond_shift_mlp: jax.Array
    cond_scale_mlp: jax.Array
    cond_gate_mlp: jax.Array


# ---------------------------------------------------------------------------
# Helpers: rounding, generation-dependent tile budgets, VMEM limits
# ---------------------------------------------------------------------------
def _round_up(x: int, m: int) -> int:
    return ((x + m - 1) // m) * m


def _vmem_capacity_bytes() -> int:
    try:
        info = pltpu.get_tpu_info()
        for attr in ("vmem_capacity_bytes", "vmem_size_bytes", "vmem_bytes"):
            v = getattr(info, attr, None)
            if v:
                return int(v)
    except Exception:
        pass
    return 64 << 20  # conservative default (v7x physical VMEM)


@functools.lru_cache(maxsize=None)
def _tile_budgets():
    cap = _vmem_capacity_bytes()
    if cap <= (64 << 20):
        # v7x: fast HBM (3.2 TB/s) makes per-step overhead expensive at small
        # tiles -> larger streaming tiles (still far below 64 MiB physical).
        return {"w_tile_bytes": 12 << 20, "ln_tile_f32_bytes": 4 << 20}
    # v5e / v6e (128 MiB physical VMEM, slower HBM): modest tiles suffice and
    # keep v5e's smaller scoped VMEM comfortable.
    return {"w_tile_bytes": 6 << 20, "ln_tile_f32_bytes": 2 << 20}


def _vmem_limit(need_bytes: int) -> int:
    # 25% headroom + 4 MiB slack, clamped to [32 MiB, 56 MiB] so we always stay
    # under v7x's 64 MiB physical VMEM while never under-provisioning badly.
    return int(min(max(need_bytes * 5 // 4 + (4 << 20), 32 << 20), 56 << 20))


# ---------------------------------------------------------------------------
# Kernel 1: Linear  (time_embed @ W + b), tiled over the output axis.
# ---------------------------------------------------------------------------
def _linear_kernel(t_ref, w_ref, b_ref, o_ref):
    # t_ref: (B, E) -- constant block index => resident across the grid
    # w_ref: (E, TF), b_ref: (1, TF), o_ref: (B, TF)
    acc = jnp.dot(t_ref[...], w_ref[...], preferred_element_type=jnp.float32)
    o_ref[...] = (acc + b_ref[...].astype(jnp.float32)).astype(o_ref.dtype)


def linear_pallas(time_embed, weight, bias, *, out_dtype=None):
    B, E = time_embed.shape
    E2, F = weight.shape
    assert E == E2 and bias.shape == (F,)
    out_dtype = out_dtype or time_embed.dtype

    budgets = _tile_budgets()
    w_isz = jnp.dtype(weight.dtype).itemsize
    t_isz = jnp.dtype(time_embed.dtype).itemsize
    b_isz = jnp.dtype(bias.dtype).itemsize
    o_isz = jnp.dtype(out_dtype).itemsize

    # Columns per weight tile so each streamed W tile is ~w_tile_bytes.
    tf_cols = max(128, budgets["w_tile_bytes"] // max(E * w_isz, 1))
    n_tiles = max(1, pl.cdiv(F, tf_cols))
    if F > 128:
        n_tiles = max(n_tiles, 2)       # >=2 steps: pipeline overlap + megacore
        if n_tiles % 2:
            n_tiles += 1                # even tile count keeps both v7x TCs busy
    TF = min(_round_up(pl.cdiv(F, n_tiles), 128), _round_up(F, 128))
    grid = (pl.cdiv(F, TF),)            # non-dividing TF: OOB cols dropped on store

    need = (2 * E * TF * w_isz + 2 * B * TF * o_isz + 2 * TF * b_isz
            + 2 * B * E * t_isz + 2 * B * TF * 4)

    cost = pl.CostEstimate(
        flops=2 * B * E * F,
        transcendentals=0,
        bytes_accessed=E * F * w_isz + B * E * t_isz + F * b_isz + B * F * o_isz,
    )

    return pl.pallas_call(
        _linear_kernel,
        out_shape=jax.ShapeDtypeStruct((B, F), out_dtype),
        grid=grid,
        in_specs=[
            pl.BlockSpec((B, E), lambda j: (0, 0)),
            pl.BlockSpec((E, TF), lambda j: (0, j)),
            pl.BlockSpec((1, TF), lambda j: (0, j)),
        ],
        out_specs=pl.BlockSpec((B, TF), lambda j: (0, j)),
        compiler_params=pltpu.CompilerParams(
            dimension_semantics=("parallel",),
            vmem_limit_bytes=_vmem_limit(need)),
        cost_estimate=cost,
    )(time_embed, weight, bias.reshape(1, F))


# ---------------------------------------------------------------------------
# Kernel 2: FP32 LayerNorm (eps=1e-5, no affine, two-pass variance) fused
#           with modulation: y = ln(x) * (1 + scale) + shift
# ---------------------------------------------------------------------------
def _ln_modulate_kernel(x_ref, scale_ref, shift_ref, o_ref):
    # x_ref: (1, TS, D), scale_ref/shift_ref: (1, 1, D), o_ref: (1, TS, D)
    x = x_ref[...].astype(jnp.float32)                          # one up-cast
    inv_d = 1.0 / x.shape[-1]
    mean = jnp.sum(x, axis=-1, keepdims=True) * inv_d
    xc = x - mean
    var = jnp.sum(xc * xc, axis=-1, keepdims=True) * inv_d      # two-pass (== ref)
    xn = xc * jax.lax.rsqrt(var + 1e-5)
    scale = scale_ref[...].astype(jnp.float32)                  # broadcast over TS
    shift = shift_ref[...].astype(jnp.float32)
    o_ref[...] = (xn * (1.0 + scale) + shift).astype(o_ref.dtype)  # one down-cast


def ln_modulate_pallas(x, scale, shift):
    B, S, D = x.shape
    assert scale.shape == (B, D) and shift.shape == (B, D)

    budgets = _tile_budgets()
    rows = max(8, (budgets["ln_tile_f32_bytes"] // (D * 4)) // 8 * 8)
    S_pad = _round_up(S, 8)
    TS = min(rows, S_pad)
    # Keep >= 2 sequence tiles when S allows (pipeline overlap, v7x megacore).
    if S_pad >= 16 and pl.cdiv(S, TS) < 2:
        TS = max(8, _round_up(pl.cdiv(S, 2), 8))
    # Non-dividing TS is safe: LN reduces only along D (full in every block),
    # padded rows never contaminate valid rows, OOB rows dropped on write-back.
    grid = (B, pl.cdiv(S, TS))

    x_isz = jnp.dtype(x.dtype).itemsize
    s_isz = jnp.dtype(scale.dtype).itemsize
    need = 4 * TS * D * x_isz + 4 * TS * D * 4 + 8 * D * 4

    cost = pl.CostEstimate(
        flops=8 * B * S * D,
        transcendentals=B * S,
        bytes_accessed=2 * B * S * D * x_isz + 2 * B * D * s_isz,
    )

    scale3 = scale.reshape(B, 1, D)
    shift3 = shift.reshape(B, 1, D)

    return pl.pallas_call(
        _ln_modulate_kernel,
        out_shape=jax.ShapeDtypeStruct((B, S, D), x.dtype),
        grid=grid,
        in_specs=[
            pl.BlockSpec((1, TS, D), lambda b, s: (b, s, 0)),
            pl.BlockSpec((1, 1, D), lambda b, s: (b, 0, 0)),
            pl.BlockSpec((1, 1, D), lambda b, s: (b, 0, 0)),
        ],
        out_specs=pl.BlockSpec((1, TS, D), lambda b, s: (b, s, 0)),
        compiler_params=pltpu.CompilerParams(
            dimension_semantics=("parallel", "parallel"),
            vmem_limit_bytes=_vmem_limit(need)),
        cost_estimate=cost,
    )(x, scale3, shift3)


def _ln_modulate_jax(x, scale, shift):
    # Fused plain-JAX path for tiny streams (short text conditioning) where a
    # 1-2 step pallas grid would pay launch/ramp cost for microseconds of work.
    x32 = x.astype(jnp.float32)
    mu = jnp.mean(x32, axis=-1, keepdims=True)
    xc = x32 - mu
    var = jnp.mean(xc * xc, axis=-1, keepdims=True)
    xn = xc * jax.lax.rsqrt(var + 1e-5)
    y = (xn * (1.0 + scale[:, None, :].astype(jnp.float32))
         + shift[:, None, :].astype(jnp.float32))
    return y.astype(x.dtype)


def _ln_modulate(x, scale, shift, min_pallas_tokens):
    if x.shape[1] < max(min_pallas_tokens, 8):
        return _ln_modulate_jax(x, scale, shift)
    return ln_modulate_pallas(x, scale, shift)


# ---------------------------------------------------------------------------
# Module wrapper
# ---------------------------------------------------------------------------
def ada_layer_norm_zero(hidden_states, encoder_hidden_states, time_embed,
                        linear_weight, linear_bias, *, min_pallas_tokens=256):
    """Forward pass of AdaLayerNormZero.

    hidden_states:          (B, S_img, D)
    encoder_hidden_states:  (B, S_txt, D)
    time_embed:             (B, E)
    linear_weight:          (E, 12*D)   (transposed nn.Linear weight; store it
                                         in bf16 to halve the HBM-bound linear)
    linear_bias:            (12*D,)
    min_pallas_tokens:      sequences shorter than this use a fused XLA path
                            instead of a degenerate 1-step Pallas grid.
    """
    B = hidden_states.shape[0]
    D = hidden_states.shape[-1]

    emb = linear_pallas(time_embed, linear_weight, linear_bias)  # (B, 12*D)

    # chunk(12, dim=1) — free reshape + contiguous lane-dense slices,
    # same order as the PyTorch module.
    emb3 = emb.reshape(B, 12, D)
    (shift_msa, c_shift_msa, scale_msa, c_scale_msa, gate_msa, c_gate_msa,
     shift_mlp, c_shift_mlp, scale_mlp, c_scale_mlp, gate_mlp, c_gate_mlp) = (
        emb3[:, 0], emb3[:, 1], emb3[:, 2], emb3[:, 3],
        emb3[:, 4], emb3[:, 5], emb3[:, 6], emb3[:, 7],
        emb3[:, 8], emb3[:, 9], emb3[:, 10], emb3[:, 11])

    hs = _ln_modulate(hidden_states, scale_msa, shift_msa, min_pallas_tokens)
    ehs = _ln_modulate(encoder_hidden_states, c_scale_msa, c_shift_msa,
                       min_pallas_tokens)

    return AdaLayerNormZeroOutput(
        hidden_states=hs,
        img_gate_msa=gate_msa,
        img_shift_mlp=shift_mlp,
        img_scale_mlp=scale_mlp,
        img_gate_mlp=gate_mlp,
        encoder_hidden_states=ehs,
        cond_gate_msa=c_gate_msa,
        cond_shift_mlp=c_shift_mlp,
        cond_scale_mlp=c_scale_mlp,
        cond_gate_mlp=c_gate_mlp,
    )


# ---------------------------------------------------------------------------
# Pure-JAX reference for sanity checking
# ---------------------------------------------------------------------------
def _ref_forward(hidden_states, encoder_hidden_states, time_embed, w, b):
    D = hidden_states.shape[-1]

    def ln(x):
        x32 = x.astype(jnp.float32)
        mu = jnp.mean(x32, axis=-1, keepdims=True)
        var = jnp.mean(jnp.square(x32 - mu), axis=-1, keepdims=True)
        return ((x32 - mu) * jax.lax.rsqrt(var + 1e-5)).astype(x.dtype)

    emb = time_embed @ w + b
    ck = [emb[:, i * D:(i + 1) * D] for i in range(12)]
    (shift_msa, c_shift_msa, scale_msa, c_scale_msa, _gm, _cgm,
     _smlp, _csmlp, _sclmlp, _csclmlp, _gmlp, _cgmlp) = ck
    hs = ln(hidden_states) * (1 + scale_msa[:, None, :]) + shift_msa[:, None, :]
    ehs = (ln(encoder_hidden_states) * (1 + c_scale_msa[:, None, :])
           + c_shift_msa[:, None, :])
    return hs, ehs, emb


if __name__ == "__main__":
    # Small deterministic shapes: B=2, dim D=128 (lane-dense), E=32,
    # S_img=64, S_txt=16.
    B, D, E, S_IMG, S_TXT = 2, 128, 32, 64, 16

    key = jax.random.PRNGKey(0)
    k1, k2, k3, k4, k5 = jax.random.split(key, 5)

    hidden_states = jax.random.normal(k1, (B, S_IMG, D), dtype=jnp.float32)
    encoder_hidden_states = jax.random.normal(k2, (B, S_TXT, D), dtype=jnp.float32)
    time_embed = jax.random.normal(k3, (B, E), dtype=jnp.float32)

    # nn.Linear(embedding_dim, 12*dim) parameters, stored transposed (E, 12*D)
    linear_weight = (jax.random.normal(k4, (E, 12 * D), dtype=jnp.float32)
                     * (1.0 / jnp.sqrt(E)))
    linear_bias = jax.random.normal(k5, (12 * D,), dtype=jnp.float32) * 0.02

    # Force the Pallas LN path for both streams (production default skips
    # Pallas for tiny text streams).
    out = ada_layer_norm_zero(hidden_states, encoder_hidden_states, time_embed,
                              linear_weight, linear_bias, min_pallas_tokens=1)
    out = jax.block_until_ready(out)

    # sanity check against pure-JAX reference
    ref_hs, ref_ehs, ref_emb = _ref_forward(
        hidden_states, encoder_hidden_states, time_embed,
        linear_weight, linear_bias)

    assert jnp.allclose(out.hidden_states, ref_hs, atol=1e-4, rtol=1e-4)
    assert jnp.allclose(out.encoder_hidden_states, ref_ehs, atol=1e-4, rtol=1e-4)
    assert jnp.allclose(out.img_gate_msa, ref_emb[:, 4 * D:5 * D], atol=1e-4)
    assert jnp.allclose(out.img_shift_mlp, ref_emb[:, 6 * D:7 * D], atol=1e-4)
    assert jnp.allclose(out.cond_gate_mlp, ref_emb[:, 11 * D:12 * D], atol=1e-4)

    # Default dispatch (tiny streams -> fused XLA path) must agree with the
    # Pallas path.
    out_default = jax.block_until_ready(ada_layer_norm_zero(
        hidden_states, encoder_hidden_states, time_embed,
        linear_weight, linear_bias))
    assert jnp.allclose(out_default.hidden_states, out.hidden_states,
                        atol=1e-5, rtol=1e-5)
    assert jnp.allclose(out_default.encoder_hidden_states,
                        out.encoder_hidden_states, atol=1e-5, rtol=1e-5)

    # bf16 weight path (the main perf lever: halves the linear's HBM traffic).
    out_bf16 = jax.block_until_ready(ada_layer_norm_zero(
        hidden_states, encoder_hidden_states, time_embed,
        linear_weight.astype(jnp.bfloat16), linear_bias, min_pallas_tokens=1))
    assert jnp.allclose(out_bf16.img_gate_msa, ref_emb[:, 4 * D:5 * D],
                        atol=5e-2, rtol=5e-2)

    print("KERNEL_OK")
</pallas_src>

<mosaic_0001>
module attributes {stable_mosaic.version = 11 : i64} {
  func.func @_linear_kernel(%arg0: i32, %arg1: memref<2x32xf32, #tpu.memory_space<vmem>>, %arg2: memref<32x768xf32, #tpu.memory_space<vmem>>, %arg3: memref<1x768xf32, #tpu.memory_space<vmem>>, %arg4: memref<2x768xf32, #tpu.memory_space<vmem>>) attributes {dimension_semantics = [#tpu.dimension_semantics<parallel>], iteration_bounds = array<i64: 2>, scalar_prefetch = 0 : i64, scratch_operands = 0 : i64, tpu.core_type = #tpu.core_type<tc>, window_params = [{pipeline_mode = #tpu.pipeline_mode<synchronous>, transform_indices = @transform_0, window_bounds = array<i64: 2, 32>}, {transform_indices = @transform_1, window_bounds = array<i64: 32, 768>}, {transform_indices = @transform_2, window_bounds = array<i64: 1, 768>}, {transform_indices = @transform_3, window_bounds = array<i64: 2, 768>}]} {
    %c0 = arith.constant 0 : index
    %c0_0 = arith.constant 0 : index
    %0 = vector.load %arg1[%c0, %c0_0] : memref<2x32xf32, #tpu.memory_space<vmem>>, vector<2x32xf32>
    %c0_1 = arith.constant 0 : index
    %c0_2 = arith.constant 0 : index
    %1 = vector.load %arg2[%c0_1, %c0_2] : memref<32x768xf32, #tpu.memory_space<vmem>>, vector<32x768xf32>
    %cst = arith.constant dense<0.000000e+00> : vector<2x768xf32>
    %2 = tpu.matmul %0, %1, %cst {dimension_numbers = #tpu.dot_dimension_numbers<[1], [0], [0], [1], [0, 0, 1, 1], [], []>} : vector<2x32xf32>, vector<32x768xf32>, vector<2x768xf32> -> vector<2x768xf32>
    %c0_3 = arith.constant 0 : index
    %c0_4 = arith.constant 0 : index
    %3 = vector.load %arg3[%c0_3, %c0_4] : memref<1x768xf32, #tpu.memory_space<vmem>>, vector<1x768xf32>
    %4 = vector.broadcast %3 : vector<1x768xf32> to vector<2x768xf32>
    %5 = arith.addf %2, %4 : vector<2x768xf32>
    %c0_5 = arith.constant 0 : index
    %c0_6 = arith.constant 0 : index
    %6 = vector.load %arg4[%c0_5, %c0_6] : memref<2x768xf32, #tpu.memory_space<vmem>>, vector<2x768xf32>
    tpu.vector_store %arg4[%c0_5, %c0_6], %5 {strides = array<i32>} : memref<2x768xf32, #tpu.memory_space<vmem>>, vector<2x768xf32>,
    return
  }
  func.func @transform_0(%arg0: i32) -> (i32, i32) {
    %c0_i32 = arith.constant 0 : i32
    %c0_i32_0 = arith.constant 0 : i32
    %c0_i32_1 = arith.constant 0 : i32
    return %c0_i32, %c0_i32_0 : i32, i32
  }
  func.func @transform_1(%arg0: i32) -> (i32, i32) {
    %c0_i32 = arith.constant 0 : i32
    %c0_i32_0 = arith.constant 0 : i32
    return %c0_i32, %arg0 : i32, i32
  }
  func.func @transform_2(%arg0: i32) -> (i32, i32) {
    %c0_i32 = arith.constant 0 : i32
    %c0_i32_0 = arith.constant 0 : i32
    return %c0_i32, %arg0 : i32, i32
  }
  func.func @transform_3(%arg0: i32) -> (i32, i32) {
    %c0_i32 = arith.constant 0 : i32
    %c0_i32_0 = arith.constant 0 : i32
    return %c0_i32, %arg0 : i32, i32
  }
}

</mosaic_0001>

<llo_original>
// kernel: tpu_custom_call.1
$region0: #{tpu_custom_call.1}
  #allocation0 [shape = 'u32[]', space=smem, size = 0x4, offset = 0x4, fixed_abs, tag = 'smem constant byte address 0x4 - core index']
  #allocation1 [shape = 'u32[72,128]{1,0:T(1,128)}', space=vmem, size = 0x9000, scoped, tag = 'internal scratch']
  %s0 = inlined_call_operand.hbm [shape: f32[2,32], index: 0, kind: input, shape index: {}]
  %s1 = inlined_call_operand.hbm [shape: f32[32,1536], index: 1, kind: input, shape index: {}]
  %s2 = inlined_call_operand.hbm [shape: f32[1,1536], index: 2, kind: input, shape index: {}]
  %s3 = inlined_call_operand.hbm [shape: f32[2,1536], index: 3, kind: output, shape index: {}]
  %s4 = sld [smem:[#allocation0]]
  $region57: #{tpu_custom_call.1} parent=0
    _
  %s6 = ssub.s32 1, %s4
  %s7 = scalar_select 0, %s6, %s4
  $region1: #{tpu_custom_call.1} parent=0
    #allocation2 [shape = 'u8[1024]{0}', space=vmem, size = 0x400, scoped, tag = 'input window, operand 0, single buffered']
    #allocation3 [shape = 's32[2]{0}', space=sflag, size = 0x8, scoped, tag = 'scoped memory for tpu_custom_call.1']
    #allocation4 [shape = 's32[2]{0}', space=sflag, size = 0x8, scoped, tag = 'scoped memory for tpu_custom_call.1']
    #allocation5 [shape = 'u8[196608]{0}', space=vmem, size = 0x30000, scoped, tag = 'input window, operand 1']
    #allocation6 [shape = 's32[2]{0}', space=sflag, size = 0x8, scoped, tag = 'scoped memory for tpu_custom_call.1']
    #allocation7 [shape = 'u8[6144]{0}', space=vmem, size = 0x1800, scoped, tag = 'input window, operand 2']
    #allocation8 [shape = 'u8[12288]{0}', space=vmem, size = 0x3000, scoped, tag = 'output window, operand 0']
    %8 = vsyncpa [#allocation3], 0
    %9 = vsyncpa [#allocation6], 0
    %s10 = scalar_lea.sflag [#allocation6], 1
    %11 = vsyncpa %s10, 0
    %12 = vsyncpa [#allocation4], 0
    %s13 = scalar_lea.sflag [#allocation4], 1
    %14 = vsyncpa %s13, 0
    loop: start=0, step=1, limit=4
    $region2: #{tpu_custom_call.1} parent=1 // loop_pre_header
      _
    $region3: #{tpu_custom_call.1} parent=1 // loop_header
      %s16 = sphi 0, %s20
      %p17 = scmp.ge.s32.totalorder %s16, 4
      %s24 = sphi 0, %s24
      %s26 = sphi 0, %s24
      %s27 = sphi 0, %s26
      %s41 = sphi 0, %s27
      %s47 = sphi 0, %s49
      %s50 = sphi 0, %s47
      %s51 = sphi 0, %s50
      %s67 = sphi 0, %s51
      %s73 = sphi 0, %s75
      %s76 = sphi 0, %s73
      %s77 = sphi 0, %s76
      %s93 = sphi 0, %s77
      %s99 = sphi 0, %s101
      %s102 = sphi 0, %s99
      %s103 = sphi 0, %s102
      %s119 = sphi 0, %s103
    $region4: #{tpu_custom_call.1} parent=1 // loop_header_branch
      %19 = sbr.rel (%p17) target = $region8
    $region5: #{tpu_custom_call.1} parent=1 // loop_body
      %s21 = ssub.s32 %s16, 1
      %s22 = ssub.s32 %s16, 2
      %s23 = sadd.s32 %s16, 1
      %s25 = sadd.s32 %s24, 1
      %p28 = scmp.eq.s32.totalorder %s16, 1
      %p29 = scmp.ne.s32.totalorder %s24, %s26
      %p30 = scmp.eq.s32.totalorder %s16, 0
      %p31 = por %p29, %p30
      %p32 = scmp.ne.s32.totalorder %s24, %s26
      %p33 = scmp.eq.s32.totalorder %s21, 1
      %p34 = por %p32, %p33
      %p35 = scmp.ne.s32.totalorder %s26, %s27
      %p36 = scmp.eq.s32.totalorder %s21, 0
      %p37 = por %p35, %p36
      %p38 = scmp.ne.s32.totalorder %s26, %s27
      %p39 = scmp.eq.s32.totalorder %s22, 1
      %p40 = por %p38, %p39
      %p42 = scmp.ne.s32.totalorder %s27, %s41
      %p43 = scmp.eq.s32.totalorder %s22, 0
      %p44 = por %p42, %p43
      %s45 = ssub.s32 %s16, %s23
      %p46 = scmp.eq.s32.totalorder %s45, 0
      %s48 = sadd.s32 %s47, 1
      %s49 = scalar_select %p46, %s47, %s48
      %p52 = pneg %p46
      %p53 = scmp.eq.s32.totalorder %s16, 1
      %p54 = por %p52, %p53
      %p55 = scmp.ne.s32.totalorder %s47, %s50
      %p56 = scmp.eq.s32.totalorder %s16, 0
      %p57 = por %p55, %p56
      %p58 = scmp.ne.s32.totalorder %s47, %s50
      %p59 = scmp.eq.s32.totalorder %s21, 1
      %p60 = por %p58, %p59
      %p61 = scmp.ne.s32.totalorder %s50, %s51
      %p62 = scmp.eq.s32.totalorder %s21, 0
      %p63 = por %p61, %p62
      %p64 = scmp.ne.s32.totalorder %s50, %s51
      %p65 = scmp.eq.s32.totalorder %s22, 1
      %p66 = por %p64, %p65
      %p68 = scmp.ne.s32.totalorder %s51, %s67
      %p69 = scmp.eq.s32.totalorder %s22, 0
      %p70 = por %p68, %p69
      %s71 = ssub.s32 %s16, %s23
      %p72 = scmp.eq.s32.totalorder %s71, 0
      %s74 = sadd.s32 %s73, 1
      %s75 = scalar_select %p72, %s73, %s74
      %p78 = pneg %p72
      %p79 = scmp.eq.s32.totalorder %s16, 1
      %p80 = por %p78, %p79
      %p81 = scmp.ne.s32.totalorder %s73, %s76
      %p82 = scmp.eq.s32.totalorder %s16, 0
      %p83 = por %p81, %p82
      %p84 = scmp.ne.s32.totalorder %s73, %s76
      %p85 = scmp.eq.s32.totalorder %s21, 1
      %p86 = por %p84, %p85
      %p87 = scmp.ne.s32.totalorder %s76, %s77
      %p88 = scmp.eq.s32.totalorder %s21, 0
      %p89 = por %p87, %p88
      %p90 = scmp.ne.s32.totalorder %s76, %s77
      %p91 = scmp.eq.s32.totalorder %s22, 1
      %p92 = por %p90, %p91
      %p94 = scmp.ne.s32.totalorder %s77, %s93
      %p95 = scmp.eq.s32.totalorder %s22, 0
      %p96 = por %p94, %p95
      %s97 = ssub.s32 %s16, %s23
      %p98 = scmp.eq.s32.totalorder %s97, 0
      %s100 = sadd.s32 %s99, 1
      %s101 = scalar_select %p98, %s99, %s100
      %p104 = pneg %p98
      %p105 = scmp.eq.s32.totalorder %s16, 1
      %p106 = por %p104, %p105
      %p107 = scmp.ne.s32.totalorder %s99, %s102
      %p108 = scmp.eq.s32.totalorder %s16, 0
      %p109 = por %p107, %p108
      %p110 = scmp.ne.s32.totalorder %s99, %s102
      %p111 = scmp.eq.s32.totalorder %s21, 1
      %p112 = por %p110, %p111
      %p113 = scmp.ne.s32.totalorder %s102, %s103
      %p114 = scmp.eq.s32.totalorder %s21, 0
      %p115 = por %p113, %p114
      %p116 = scmp.ne.s32.totalorder %s102, %s103
      %p117 = scmp.eq.s32.totalorder %s22, 1
      %p118 = por %p116, %p117
      %p120 = scmp.ne.s32.totalorder %s103, %s119
      %p121 = scmp.eq.s32.totalorder %s22, 0
      %p122 = por %p120, %p121
      %p123 = scmp.le.s32.totalorder 1, %s16
      %p124 = scmp.lt.s32.totalorder %s16, 3
      %p125 = pnand %p123, %p124
      %p126 = pneg %p125
      // Predicated region
      $region9: #{tpu_custom_call.1} parent=5 // pred_check
        _
      $region10: #{tpu_custom_call.1} parent=5 // pred_check_branch
        %128 = sbr.rel (%p125) target = $region12
      $region11: #{tpu_custom_call.1} parent=5 // pred_region
        %s129 = ssub.s32 %s16, 1
        // Predicated region
        $region13: #{tpu_custom_call.1} parent=11 // pred_check
          %p130 = pneg %p37
        $region14: #{tpu_custom_call.1} parent=11 // pred_check_branch
          %132 = sbr.rel (%p130) target = $region16
        $region15: #{tpu_custom_call.1} parent=11 // pred_region
          %134 = vsyncadd [#allocation3], 0
          %s136 = sshll.u32 %s0, 4
          %s137 = int_to_ptr.hbm [resolvable:$true] %s136
          %s138 = sshll.u32 [#allocation2], 4
          %s139 = int_to_ptr.vmem [resolvable:$true] %s138
          %141 = dma.hbm_to_vmem [thread:$0]  %s137, 32, %s139, [#allocation3]
        $region16: #{tpu_custom_call.1} parent=11 // pred_fallthru
          _
      $region12: #{tpu_custom_call.1} parent=5 // pred_fallthru
        _
      %p142 = scmp.lt.s32.totalorder %s16, 2
      // Predicated region
      $region17: #{tpu_custom_call.1} parent=5 // pred_check
        %p143 = pneg %p142
      $region18: #{tpu_custom_call.1} parent=5 // pred_check_branch
        %145 = sbr.rel (%p143) target = $region20
      $region19: #{tpu_custom_call.1} parent=5 // pred_region
        // Predicated region
        $region21: #{tpu_custom_call.1} parent=19 // pred_check
          %p146 = pneg %p57
        $region22: #{tpu_custom_call.1} parent=19 // pred_check_branch
          %148 = sbr.rel (%p146) target = $region24
        $region23: #{tpu_custom_call.1} parent=19 // pred_region
          %s149 = sand.u32 %s16, 1
          %s150 = scalar_lea.sflag [#allocation6], %s149
          %s151 = sand.u32 %s47, 1
          %s152 = smul.addr %s151, 192
          %s153 = scalar_lea.vmem [#allocation5], %s152
          %s154 = smul.u32 6, %s16
          %156 = vsyncadd %s150, 0
          %s157 = smul.addr %s154, 8
          %s158 = scalar_lea.hbm %s1, %s157
          %s159 = sshll.u32 %s158, 4
          %s160 = int_to_ptr.hbm [resolvable:$true] %s159
          %s161 = sshll.u32 %s153, 4
          %s162 = int_to_ptr.vmem [resolvable:$true] %s161
          %167 = dma.hbm_to_vmem [thread:$0]  %s160, 3072, %s162, %s150, 1536, 768, 48
        $region24: #{tpu_custom_call.1} parent=19 // pred_fallthru
          _
        // Predicated region
        $region25: #{tpu_custom_call.1} parent=19 // pred_check
          %p168 = pneg %p83
        $region26: #{tpu_custom_call.1} parent=19 // pred_check_branch
          %170 = sbr.rel (%p168) target = $region28
        $region27: #{tpu_custom_call.1} parent=19 // pred_region
          %s171 = sand.u32 %s16, 1
          %s172 = scalar_lea.sflag [#allocation6], %s171
          %s173 = sand.u32 %s73, 1
          %s174 = smul.addr %s173, 6
          %s175 = scalar_lea.vmem [#allocation7], %s174
          %s176 = smul.u32 6, %s16
          %178 = vsyncadd %s172, 0
          %s179 = scalar_lea.hbm %s2, %s176
          %s181 = sshll.u32 %s179, 4
          %s182 = int_to_ptr.hbm [resolvable:$true] %s181
          %s183 = sshll.u32 %s175, 4
          %s184 = int_to_ptr.vmem [resolvable:$true] %s183
          %186 = dma.hbm_to_vmem [thread:$0]  %s182, 96, %s184, %s172
        $region28: #{tpu_custom_call.1} parent=19 // pred_fallthru
          _
      $region20: #{tpu_custom_call.1} parent=5 // pred_fallthru
        _
      %p187 = scmp.le.s32.totalorder 1, %s16
      %p188 = scmp.lt.s32.totalorder %s16, 3
      %p189 = pnand %p187, %p188
      %p190 = pneg %p189
      // Predicated region
      $region29: #{tpu_custom_call.1} parent=5 // pred_check
        _
      $region30: #{tpu_custom_call.1} parent=5 // pred_check_branch
        %192 = sbr.rel (%p189) target = $region32
      $region31: #{tpu_custom_call.1} parent=5 // pred_region
        %s193 = ssub.s32 %s16, 1
        // Predicated region
        $region33: #{tpu_custom_call.1} parent=31 // pred_check
          %p194 = pneg %p37
        $region34: #{tpu_custom_call.1} parent=31 // pred_check_branch
          %196 = sbr.rel (%p194) target = $region36
        $region35: #{tpu_custom_call.1} parent=31 // pred_region
          %198 = dma.done [#allocation3], 32
        $region36: #{tpu_custom_call.1} parent=31 // pred_fallthru
          _
        %s199 = sand.u32 %s21, 1
        %s200 = scalar_lea.sflag [#allocation6], %s199
        %s201 = sand.u32 %s50, 1
        %s202 = smul.addr %s201, 192
        %s203 = scalar_lea.vmem [#allocation5], %s202
        // Predicated region
        $region37: #{tpu_custom_call.1} parent=31 // pred_check
          %p204 = pneg %p63
        $region38: #{tpu_custom_call.1} parent=31 // pred_check_branch
          %206 = sbr.rel (%p204) target = $region40
        $region39: #{tpu_custom_call.1} parent=31 // pred_region
          %208 = dma.done %s200, 3072
        $region40: #{tpu_custom_call.1} parent=31 // pred_fallthru
          _
        %s209 = sand.u32 %s21, 1
        %s210 = scalar_lea.sflag [#allocation6], %s209
        %s211 = sand.u32 %s76, 1
        %s212 = smul.addr %s211, 6
        %s213 = scalar_lea.vmem [#allocation7], %s212
        // Predicated region
        $region41: #{tpu_custom_call.1} parent=31 // pred_check
          %p214 = pneg %p89
        $region42: #{tpu_custom_call.1} parent=31 // pred_check_branch
          %216 = sbr.rel (%p214) target = $region44
        $region43: #{tpu_custom_call.1} parent=31 // pred_region
          %218 = dma.done %s210, 96
        $region44: #{tpu_custom_call.1} parent=31 // pred_fallthru
          _
        %p219 = pneg %p37
        %p220 = pneg %p34
        %s221 = sand.u32 %s21, 1
        %s222 = scalar_lea.sflag [#allocation6], %s221
        %s223 = sand.u32 %s50, 1
        %s224 = smul.addr %s223, 192
        %s225 = scalar_lea.vmem [#allocation5], %s224
        %p226 = pneg %p63
        %p227 = pneg %p60
        %s228 = sand.u32 %s21, 1
        %s229 = scalar_lea.sflag [#allocation6], %s228
        %s230 = sand.u32 %s76, 1
        %s231 = smul.addr %s230, 6
        %s232 = scalar_lea.vmem [#allocation7], %s231
        %p233 = pneg %p89
        %p234 = pneg %p86
        %p235 = pneg %p115
        %p236 = pneg %p112
        %s237 = sand.u32 %s102, 1
        %s238 = scalar_lea.sflag [#allocation4], %s237
        %s239 = sand.u32 %s102, 1
        %s240 = smul.addr %s239, 12
        %s241 = scalar_lea.vmem [#allocation8], %s240
        %s242 = smul.u32 6, %s21
        %s243 = smul.u32 6, %s21
        %s244 = smul.u32 6, %s21
        %v245 = vld [vmem:[#allocation2] sm:$0x3]
        %v246 = vld [vmem:[%s203] sm:$0xff]
        %v247 = vld [vmem:[%s203 + $0x8] sm:$0xff]
        %v248 = vld [vmem:[%s203 + $0x10] sm:$0xff]
        %v249 = vld [vmem:[%s203 + $0x18] sm:$0xff]
        %v250 = vld [vmem:[%s203 + $0x20] sm:$0xff]
        %v251 = vld [vmem:[%s203 + $0x28] sm:$0xff]
        %v252 = vld [vmem:[%s203 + $0x30] sm:$0xff]
        %v253 = vld [vmem:[%s203 + $0x38] sm:$0xff]
        %v254 = vld [vmem:[%s203 + $0x40] sm:$0xff]
        %v255 = vld [vmem:[%s203 + $0x48] sm:$0xff]
        %v256 = vld [vmem:[%s203 + $0x50] sm:$0xff]
        %v257 = vld [vmem:[%s203 + $0x58] sm:$0xff]
        %v258 = vld [vmem:[%s203 + $0x60] sm:$0xff]
        %v259 = vld [vmem:[%s203 + $0x68] sm:$0xff]
        %v260 = vld [vmem:[%s203 + $0x70] sm:$0xff]
        %v261 = vld [vmem:[%s203 + $0x78] sm:$0xff]
        %v262 = vld [vmem:[%s203 + $0x80] sm:$0xff]
        %v263 = vld [vmem:[%s203 + $0x88] sm:$0xff]
        %v264 = vld [vmem:[%s203 + $0x90] sm:$0xff]
        %v265 = vld [vmem:[%s203 + $0x98] sm:$0xff]
        %v266 = vld [vmem:[%s203 + $0xa0] sm:$0xff]
        %v267 = vld [vmem:[%s203 + $0xa8] sm:$0xff]
        %v268 = vld [vmem:[%s203 + $0xb0] sm:$0xff]
        %v269 = vld [vmem:[%s203 + $0xb8] sm:$0xff]
        %v270 = vld [vmem:[%s213] sm:$0x3f]
        %v272 = vperm.slane %v270, 0
        %v273 = vperm.slane %v270, 1
        %v274 = vperm.slane %v270, 2
        %v275 = vperm.slane %v270, 3
        %v276 = vperm.slane %v270, 4
        %v277 = vperm.slane %v270, 5
        %vm284 = vcmask 261120
        %v286 = vsel %vm284, %v245, 0
        %288 = vmatpush.msra.mxu0 0.0
        %289 = vmatpush.msra.mxu0 0.0
        %290 = vmatpush.msra.mxu0 0.0
        %291 = vmatpush.msra.mxu0 0.0
        %292 = vmatpush.msra.mxu0 0.0
        %293 = vmatpush.msra.mxu0 0.0
        %294 = vmatpush.msra.mxu0 0.0
        %295 = vmatpush.msra.mxu0 0.0
        %296 = vmatpush.msra.mxu0 0.0
        %297 = vmatpush.msra.mxu0 0.0
        %298 = vmatpush.msra.mxu0 0.0
        %299 = vmatpush.msra.mxu0 0.0
        %300 = vmatpush.msra.mxu0 %v264
        %301 = vmatpush.msra.mxu0 %v258
        %302 = vmatpush.msra.mxu0 %v252
        %303 = vmatpush.msra.mxu0 %v246
        %304 = vmatmul.f32.gmra.mxu0 %v286
        %v305 = vpop.f32.mrf.mxu0
        %v306 = vadd.f32 %v272, %v305
        %307 = vdwg.mxu0
        %308 = vmatpush.msra.mxu0 0.0
        %309 = vmatpush.msra.mxu0 0.0
        %310 = vmatpush.msra.mxu0 0.0
        %311 = vmatpush.msra.mxu0 0.0
        %312 = vmatpush.msra.mxu0 0.0
        %313 = vmatpush.msra.mxu0 0.0
        %314 = vmatpush.msra.mxu0 0.0
        %315 = vmatpush.msra.mxu0 0.0
        %316 = vmatpush.msra.mxu0 0.0
        %317 = vmatpush.msra.mxu0 0.0
        %318 = vmatpush.msra.mxu0 0.0
        %319 = vmatpush.msra.mxu0 0.0
        %320 = vmatpush.msra.mxu0 %v265
        %321 = vmatpush.msra.mxu0 %v259
        %322 = vmatpush.msra.mxu0 %v253
        %323 = vmatpush.msra.mxu0 %v247
        %324 = vmatmul.f32.gmra.mxu0 %v286
        %v325 = vpop.f32.mrf.mxu0
        %v326 = vadd.f32 %v273, %v325
        %327 = vdwg.mxu0
        %328 = vmatpush.msra.mxu0 0.0
        %329 = vmatpush.msra.mxu0 0.0
        %330 = vmatpush.msra.mxu0 0.0
        %331 = vmatpush.msra.mxu0 0.0
        %332 = vmatpush.msra.mxu0 0.0
        %333 = vmatpush.msra.mxu0 0.0
        %334 = vmatpush.msra.mxu0 0.0
        %335 = vmatpush.msra.mxu0 0.0
        %336 = vmatpush.msra.mxu0 0.0
        %337 = vmatpush.msra.mxu0 0.0
        %338 = vmatpush.msra.mxu0 0.0
        %339 = vmatpush.msra.mxu0 0.0
        %340 = vmatpush.msra.mxu0 %v266
        %341 = vmatpush.msra.mxu0 %v260
        %342 = vmatpush.msra.mxu0 %v254
        %343 = vmatpush.msra.mxu0 %v248
        %344 = vmatmul.f32.gmra.mxu0 %v286
        %v345 = vpop.f32.mrf.mxu0
        %v346 = vadd.f32 %v274, %v345
        %347 = vdwg.mxu0
        %348 = vmatpush.msra.mxu0 0.0
        %349 = vmatpush.msra.mxu0 0.0
        %350 = vmatpush.msra.mxu0 0.0
        %351 = vmatpush.msra.mxu0 0.0
        %352 = vmatpush.msra.mxu0 0.0
        %353 = vmatpush.msra.mxu0 0.0
        %354 = vmatpush.msra.mxu0 0.0
        %355 = vmatpush.msra.mxu0 0.0
        %356 = vmatpush.msra.mxu0 0.0
        %357 = vmatpush.msra.mxu0 0.0
        %358 = vmatpush.msra.mxu0 0.0
        %359 = vmatpush.msra.mxu0 0.0
        %360 = vmatpush.msra.mxu0 %v267
        %361 = vmatpush.msra.mxu0 %v261
        %362 = vmatpush.msra.mxu0 %v255
        %363 = vmatpush.msra.mxu0 %v249
        %364 = vmatmul.f32.gmra.mxu0 %v286
        %v365 = vpop.f32.mrf.mxu0
        %v366 = vadd.f32 %v275, %v365
        %367 = vdwg.mxu0
        %368 = vmatpush.msra.mxu0 0.0
        %369 = vmatpush.msra.mxu0 0.0
        %370 = vmatpush.msra.mxu0 0.0
        %371 = vmatpush.msra.mxu0 0.0
        %372 = vmatpush.msra.mxu0 0.0
        %373 = vmatpush.msra.mxu0 0.0
        %374 = vmatpush.msra.mxu0 0.0
        %375 = vmatpush.msra.mxu0 0.0
        %376 = vmatpush.msra.mxu0 0.0
        %377 = vmatpush.msra.mxu0 0.0
        %378 = vmatpush.msra.mxu0 0.0
        %379 = vmatpush.msra.mxu0 0.0
        %380 = vmatpush.msra.mxu0 %v268
        %381 = vmatpush.msra.mxu0 %v262
        %382 = vmatpush.msra.mxu0 %v256
        %383 = vmatpush.msra.mxu0 %v250
        %384 = vmatmul.f32.gmra.mxu0 %v286
        %v385 = vpop.f32.mrf.mxu0
        %v386 = vadd.f32 %v276, %v385
        %387 = vdwg.mxu0
        %388 = vmatpush.msra.mxu0 0.0
        %389 = vmatpush.msra.mxu0 0.0
        %390 = vmatpush.msra.mxu0 0.0
        %391 = vmatpush.msra.mxu0 0.0
        %392 = vmatpush.msra.mxu0 0.0
        %393 = vmatpush.msra.mxu0 0.0
        %394 = vmatpush.msra.mxu0 0.0
        %395 = vmatpush.msra.mxu0 0.0
        %396 = vmatpush.msra.mxu0 0.0
        %397 = vmatpush.msra.mxu0 0.0
        %398 = vmatpush.msra.mxu0 0.0
        %399 = vmatpush.msra.mxu0 0.0
        %400 = vmatpush.msra.mxu0 %v269
        %401 = vmatpush.msra.mxu0 %v263
        %402 = vmatpush.msra.mxu0 %v257
        %403 = vmatpush.msra.mxu0 %v251
        %404 = vmatmul.f32.gmra.mxu0 %v286
        %v405 = vpop.f32.mrf.mxu0
        %v406 = vadd.f32 %v277, %v405
        %407 = vdwg.mxu0
        %v414 = vrot.slane %v326, 6
        %v415 = vrot.slane %v346, 4
        %v416 = vrot.slane %v366, 2
        %v417 = vrot.slane %v406, 6
        %vm418 = vcmask 1041408
        %v419 = vsel %vm418, %v306, %v414
        %vm420 = vcmask 1045508
        %v421 = vsel %vm420, %v415, %v416
        %vm422 = vcmask 1043456
        %v423 = vsel %vm422, %v419, %v421
        %v424 = vsel %vm418, %v386, %v417
        %427 = vst [vmem:[%s241] sm:$0xff] %v423
        %428 = vst [vmem:[%s241 + $0x8] sm:$0xf] %v424
        %s429 = sand.u32 %s102, 1
        %s430 = scalar_lea.sflag [#allocation4], %s429
        %s431 = sand.u32 %s102, 1
        %s432 = smul.addr %s431, 12
        %s433 = scalar_lea.vmem [#allocation8], %s432
        // Predicated region
        $region45: #{tpu_custom_call.1} parent=31 // pred_check
          %p434 = pneg %p112
        $region46: #{tpu_custom_call.1} parent=31 // pred_check_branch
          %436 = sbr.rel (%p434) target = $region48
        $region47: #{tpu_custom_call.1} parent=31 // pred_region
          %s437 = smul.u32 6, %s21
          %439 = vsyncadd %s430, 0
          %s440 = smul.addr %s437, 2
          %s441 = scalar_lea.hbm %s3, %s440
          %s443 = sshll.u32 %s433, 4
          %s444 = int_to_ptr.vmem [resolvable:$true] %s443
          %s445 = sshll.u32 %s441, 4
          %s446 = int_to_ptr.hbm [resolvable:$true] %s445
          %448 = dma.vmem_to_hbm [thread:$0]  %s444, 192, %s446, %s430
        $region48: #{tpu_custom_call.1} parent=31 // pred_fallthru
          _
      $region32: #{tpu_custom_call.1} parent=5 // pred_fallthru
        _
      %p449 = scmp.le.s32.totalorder 2, %s16
      // Predicated region
      $region49: #{tpu_custom_call.1} parent=5 // pred_check
        %p450 = pneg %p449
      $region50: #{tpu_custom_call.1} parent=5 // pred_check_branch
        %452 = sbr.rel (%p450) target = $region52
      $region51: #{tpu_custom_call.1} parent=5 // pred_region
        %s453 = ssub.s32 %s16, 2
        // Predicated region
        $region53: #{tpu_custom_call.1} parent=51 // pred_check
          %p454 = pneg %p118
        $region54: #{tpu_custom_call.1} parent=51 // pred_check_branch
          %456 = sbr.rel (%p454) target = $region56
        $region55: #{tpu_custom_call.1} parent=51 // pred_region
          %s457 = sand.u32 %s103, 1
          %s458 = scalar_lea.sflag [#allocation4], %s457
          %s459 = sand.u32 %s103, 1
          %s460 = smul.addr %s459, 12
          %s461 = scalar_lea.vmem [#allocation8], %s460
          %463 = dma.done %s458, 192
        $region56: #{tpu_custom_call.1} parent=51 // pred_fallthru
          _
      $region52: #{tpu_custom_call.1} parent=5 // pred_fallthru
        _
    $region6: #{tpu_custom_call.1} parent=1 // loop_footer
      %s20 = sadd.s32 1, %s16
    $region7: #{tpu_custom_call.1} parent=1 // loop_footer_branch
      %15 = sbr.rel target = $region3
    $region8: #{tpu_custom_call.1} parent=1 // loop_exit
      _
    %464 = vsyncpa [#allocation3], 1
    %s465 = scalar_lea.sflag [#allocation3], 1
    %466 = vsyncpa %s465, 1
    %467 = vsyncpa [#allocation6], 1
    %s468 = scalar_lea.sflag [#allocation6], 1
    %469 = vsyncpa %s468, 1
    %470 = vsyncpa [#allocation4], 1
    %s471 = scalar_lea.sflag [#allocation4], 1
    %472 = vsyncpa %s471, 1

</llo_original>
